<compile_context>
chip_gen: v7x
topology: tpu7x:2x2x1
jax: 0.10.0
libtpu: 0.0.40
codegen_flags: <defaults>
</compile_context>

<pallas_src>
import math
import jax
import jax.numpy as jnp
from jax import lax
from jax.experimental import pallas as pl
from jax.experimental.pallas import tpu as pltpu


def _round_up(x, m):
    return (x + m - 1) // m * m


# ----------------------------- kernels -----------------------------

def _td_dense_kernel(d_ref, w_ref, b_ref, o_ref):
    # d_ref: (tm, F_in)        VMEM (row tile)
    # w_ref: (F_out_p, F_in)   VMEM (resident across grid, PyTorch layout)
    # b_ref: (1, F_out_p)      VMEM (resident)
    # o_ref: (tm, F_out_p)     VMEM (lane-dense, F_out_p % 128 == 0)
    x = lax.dot_general(
        d_ref[...], w_ref[...],
        dimension_numbers=(((1,), (1,)), ((), ())),   # contract F_in of both => d @ W.T
        preferred_element_type=jnp.float32)
    x = x + b_ref[...]                                 # bias broadcast over rows
    o_ref[...] = jnp.exp(-jnp.maximum(x, 0.0)).astype(o_ref.dtype)


def _td_diag_kernel(d_ref, w_ref, b_ref, o_ref):
    # Pure elementwise (VPU mul/add/max + EUP exp): gamma = exp(-relu(d * diag(W) + b))
    # d_ref/o_ref: (tm, F_p); w_ref/b_ref: (1, F_p); F_p % 128 == 0.
    x = d_ref[...] * w_ref[...] + b_ref[...]
    o_ref[...] = jnp.exp(-jnp.maximum(x, 0.0)).astype(o_ref.dtype)


# ----------------------------- wrapper -----------------------------

def temporal_decay(d, W, b, diag=False, tm=512):
    """d: (..., F_in) float32; W: (F_out, F_in); b: (F_out,). Returns (..., F_out).

    All leading dims of d are fused into one M axis and tiled with a parallel grid
    (so calling once on (B, T, F) amortizes the whole BRITS time loop)."""
    orig_lead = d.shape[:-1]
    f_in = d.shape[-1]
    f_out = W.shape[0]

    d2 = d.reshape(-1, f_in)
    M = d2.shape[0]

    # Row tile: multiple of 8 sublanes, capped at tm (sized well under v7x's 32 MiB scoped VMEM).
    tile_m = _round_up(min(M, tm), 8)
    M_p = _round_up(M, tile_m)

    parallel = pltpu.CompilerParams(dimension_semantics=("parallel",))

    if diag:
        assert f_in == f_out, "diag=True requires input_size == output_size"
        # Per-feature decay: only diag(W) is needed; never build W * I.
        # TODO(synk): diag(W)/bias padding could be hoisted to parameter-init time.
        F_p = max(_round_up(f_in, 128), 128)            # lane-dense feature dim
        w_vec = jnp.diagonal(W).reshape(1, f_in)
        d_p = jnp.pad(d2, ((0, M_p - M), (0, F_p - f_in)))
        w_p = jnp.pad(w_vec, ((0, 0), (0, F_p - f_in)))
        b_p = jnp.pad(b.reshape(1, f_out), ((0, 0), (0, F_p - f_out)))

        out = pl.pallas_call(
            _td_diag_kernel,
            out_shape=jax.ShapeDtypeStruct((M_p, F_p), d.dtype),
            grid=(M_p // tile_m,),
            in_specs=[
                pl.BlockSpec((tile_m, F_p), lambda i: (i, 0)),
                pl.BlockSpec((1, F_p), lambda i: (0, 0)),     # resident
                pl.BlockSpec((1, F_p), lambda i: (0, 0)),     # resident
            ],
            out_specs=pl.BlockSpec((tile_m, F_p), lambda i: (i, 0)),
            compiler_params=parallel,
        )(d_p, w_p, b_p)
    else:
        F_out_p = max(_round_up(f_out, 128), 128)       # lane-dense output dim
        d_p = jnp.pad(d2, ((0, M_p - M), (0, 0)))
        W_p = jnp.pad(W, ((0, F_out_p - f_out), (0, 0)))      # zero rows -> exp(0)=1, sliced off
        b_p = jnp.pad(b.reshape(1, f_out), ((0, 0), (0, F_out_p - f_out)))

        out = pl.pallas_call(
            _td_dense_kernel,
            out_shape=jax.ShapeDtypeStruct((M_p, F_out_p), d.dtype),
            grid=(M_p // tile_m,),
            in_specs=[
                pl.BlockSpec((tile_m, f_in), lambda i: (i, 0)),
                pl.BlockSpec((F_out_p, f_in), lambda i: (0, 0)),   # weights resident
                pl.BlockSpec((1, F_out_p), lambda i: (0, 0)),      # bias resident
            ],
            out_specs=pl.BlockSpec((tile_m, F_out_p), lambda i: (i, 0)),
            compiler_params=parallel,
        )(d_p, W_p, b_p)

    out = out[:M, :f_out]
    return out.reshape(orig_lead + (f_out,))


def init_params(key, input_size, output_size):
    """Deterministic init matching PyTorch reset_parameters():
       uniform(-stdv, stdv) with stdv = 1/sqrt(output_size)."""
    stdv = 1.0 / math.sqrt(output_size)
    kW, kb = jax.random.split(key)
    W = jax.random.uniform(kW, (output_size, input_size), jnp.float32, -stdv, stdv)
    b = jax.random.uniform(kb, (output_size,), jnp.float32, -stdv, stdv)
    return W, b


if __name__ == "__main__":
    key = jax.random.PRNGKey(0)
    k_d, k_p1, k_p2 = jax.random.split(key, 3)

    B, T, F_IN, F_OUT = 8, 16, 32, 32   # small shapes consistent with BRITS hidden sizes

    # Per-timestep time deltas, fused into one large-M call: (B, T, F_in)
    d_seq = jax.random.uniform(k_d, (B, T, F_IN), jnp.float32, 0.0, 2.0)
    d_single = d_seq[:, 0, :]           # plain (B, F_in) case

    W1, b1 = init_params(k_p1, F_IN, F_OUT)
    W2, b2 = init_params(k_p2, F_IN, F_IN)

    # --- diag=False, time-fused (B*T rows in one pipelined call) ---
    gamma_seq = jax.block_until_ready(temporal_decay(d_seq, W1, b1, diag=False))
    # --- diag=False, single timestep ---
    gamma_small = jax.block_until_ready(temporal_decay(d_single, W1, b1, diag=False))
    # --- diag=True, pure elementwise kernel ---
    gamma_diag = jax.block_until_ready(temporal_decay(d_seq, W2, b2, diag=True))

    # reference checks in plain JAX
    ref_seq = jnp.exp(-jnp.maximum(jnp.einsum("btf,of->bto", d_seq, W1) + b1, 0.0))
    ref_small = jnp.exp(-jnp.maximum(d_single @ W1.T + b1, 0.0))
    ref_diag = jnp.exp(-jnp.maximum(d_seq * jnp.diagonal(W2) + b2, 0.0))

    assert gamma_seq.shape == (B, T, F_OUT)
    assert gamma_small.shape == (B, F_OUT)
    assert gamma_diag.shape == (B, T, F_IN)
    assert jnp.allclose(gamma_seq, ref_seq, atol=1e-5, rtol=1e-5)
    assert jnp.allclose(gamma_small, ref_small, atol=1e-5, rtol=1e-5)
    assert jnp.allclose(gamma_diag, ref_diag, atol=1e-5, rtol=1e-5)

    print("KERNEL_OK")
</pallas_src>

<mosaic_0001>
module attributes {stable_mosaic.version = 11 : i64} {
  func.func @_td_dense_kernel(%arg0: i32, %arg1: memref<128x32xf32, #tpu.memory_space<vmem>>, %arg2: memref<128x32xf32, #tpu.memory_space<vmem>>, %arg3: memref<1x128xf32, #tpu.memory_space<vmem>>, %arg4: memref<128x128xf32, #tpu.memory_space<vmem>>) attributes {dimension_semantics = [#tpu.dimension_semantics<parallel>], iteration_bounds = array<i64: 1>, scalar_prefetch = 0 : i64, scratch_operands = 0 : i64, tpu.core_type = #tpu.core_type<tc>, window_params = [{transform_indices = @transform_0, window_bounds = array<i64: 128, 32>}, {pipeline_mode = #tpu.pipeline_mode<synchronous>, transform_indices = @transform_1, window_bounds = array<i64: 128, 32>}, {pipeline_mode = #tpu.pipeline_mode<synchronous>, transform_indices = @transform_2, window_bounds = array<i64: 1, 128>}, {transform_indices = @transform_3, window_bounds = array<i64: 128, 128>}]} {
    %c0 = arith.constant 0 : index
    %c0_0 = arith.constant 0 : index
    %0 = vector.load %arg1[%c0, %c0_0] : memref<128x32xf32, #tpu.memory_space<vmem>>, vector<128x32xf32>
    %c0_1 = arith.constant 0 : index
    %c0_2 = arith.constant 0 : index
    %1 = vector.load %arg2[%c0_1, %c0_2] : memref<128x32xf32, #tpu.memory_space<vmem>>, vector<128x32xf32>
    %cst = arith.constant dense<0.000000e+00> : vector<128x128xf32>
    %2 = tpu.matmul %0, %1, %cst {dimension_numbers = #tpu.dot_dimension_numbers<[1], [1], [0], [0], [0, 0, 1, 0], [], []>} : vector<128x32xf32>, vector<128x32xf32>, vector<128x128xf32> -> vector<128x128xf32>
    %c0_3 = arith.constant 0 : index
    %c0_4 = arith.constant 0 : index
    %3 = vector.load %arg3[%c0_3, %c0_4] : memref<1x128xf32, #tpu.memory_space<vmem>>, vector<1x128xf32>
    %4 = vector.broadcast %3 : vector<1x128xf32> to vector<128x128xf32>
    %5 = arith.addf %2, %4 : vector<128x128xf32>
    %cst_5 = arith.constant 0.000000e+00 : f32
    %6 = vector.broadcast %cst_5 : f32 to vector<128x128xf32>
    %7 = arith.maximumf %5, %6 : vector<128x128xf32>
    %cst_6 = arith.constant 0.000000e+00 : f32
    %8 = vector.broadcast %cst_6 : f32 to vector<128x128xf32>
    %9 = arith.subf %8, %7 : vector<128x128xf32>
    %10 = math.exp %9 : vector<128x128xf32>
    %c0_7 = arith.constant 0 : index
    %c0_8 = arith.constant 0 : index
    %11 = vector.load %arg4[%c0_7, %c0_8] : memref<128x128xf32, #tpu.memory_space<vmem>>, vector<128x128xf32>
    tpu.vector_store %arg4[%c0_7, %c0_8], %10 {strides = array<i32>} : memref<128x128xf32, #tpu.memory_space<vmem>>, vector<128x128xf32>,
    return
  }
  func.func @transform_0(%arg0: i32) -> (i32, i32) {
    %c0_i32 = arith.constant 0 : i32
    %c0_i32_0 = arith.constant 0 : i32
    return %arg0, %c0_i32 : i32, i32
  }
  func.func @transform_1(%arg0: i32) -> (i32, i32) {
    %c0_i32 = arith.constant 0 : i32
    %c0_i32_0 = arith.constant 0 : i32
    %c0_i32_1 = arith.constant 0 : i32
    return %c0_i32, %c0_i32_0 : i32, i32
  }
  func.func @transform_2(%arg0: i32) -> (i32, i32) {
    %c0_i32 = arith.constant 0 : i32
    %c0_i32_0 = arith.constant 0 : i32
    %c0_i32_1 = arith.constant 0 : i32
    return %c0_i32, %c0_i32_0 : i32, i32
  }
  func.func @transform_3(%arg0: i32) -> (i32, i32) {
    %c0_i32 = arith.constant 0 : i32
    %c0_i32_0 = arith.constant 0 : i32
    return %arg0, %c0_i32 : i32, i32
  }
}

</mosaic_0001>

<llo_original>
// kernel: tpu_custom_call.1
$region0: #{tpu_custom_call.1}
  #allocation0 [shape = 'u32[]', space=smem, size = 0x4, offset = 0x4, fixed_abs, tag = 'smem constant byte address 0x4 - core index']
  #allocation1 [shape = 'u32[144,128]{1,0:T(1,128)}', space=vmem, size = 0x12000, scoped, tag = 'internal scratch']
  %s0 = inlined_call_operand.vmem [shape: f32[128,32], index: 0, kind: input, shape index: {}]
  %s1 = inlined_call_operand.vmem [shape: f32[128,32], index: 1, kind: input, shape index: {}]
  %s2 = inlined_call_operand.vmem [shape: f32[1,128], index: 2, kind: input, shape index: {}]
  %s3 = inlined_call_operand.hbm [shape: f32[128,128], index: 3, kind: output, shape index: {}]
  %s4 = sld [smem:[#allocation0]]
  $region22: #{tpu_custom_call.1} parent=0
    _
  %s6 = ssub.s32 1, %s4
  %s7 = scalar_select 0, %s6, %s4
  $region1: #{tpu_custom_call.1} parent=0
    #allocation2 [shape = 'u8[65536]{0}', space=vmem, size = 0x10000, scoped, tag = 'output window, operand 0, single buffered']
    #allocation3 [shape = 's32[1]{0}', space=sflag, size = 0x4, scoped, tag = 'scoped memory for tpu_custom_call.1']
    %8 = vsyncpa [#allocation3], 0
    // Predicated region
    $region2: #{tpu_custom_call.1} parent=1 // pred_check
      _
    $region3: #{tpu_custom_call.1} parent=1 // pred_check_branch
      %10 = sbr.rel (0) target = $region5
    $region4: #{tpu_custom_call.1} parent=1 // pred_region
      _
    $region5: #{tpu_custom_call.1} parent=1 // pred_fallthru
      _
    // Predicated region
    $region6: #{tpu_custom_call.1} parent=1 // pred_check
      _
    $region7: #{tpu_custom_call.1} parent=1 // pred_check_branch
      %12 = sbr.rel (0) target = $region9
    $region8: #{tpu_custom_call.1} parent=1 // pred_region
      _
    $region9: #{tpu_custom_call.1} parent=1 // pred_fallthru
      _
    // Predicated region
    $region10: #{tpu_custom_call.1} parent=1 // pred_check
      _
    $region11: #{tpu_custom_call.1} parent=1 // pred_check_branch
      %14 = sbr.rel (0) target = $region13
    $region12: #{tpu_custom_call.1} parent=1 // pred_region
      _
    $region13: #{tpu_custom_call.1} parent=1 // pred_fallthru
      _
    %v15 = vld [vmem:[%s0] sm:$0xff]
    %v16 = vld [vmem:[%s0 + $0x8] sm:$0xff]
    %v17 = vld [vmem:[%s0 + $0x10] sm:$0xff]
    %v18 = vld [vmem:[%s0 + $0x18] sm:$0xff]
    %v19 = vld [vmem:[%s0 + $0x20] sm:$0xff]
    %v20 = vld [vmem:[%s0 + $0x28] sm:$0xff]
    %v21 = vld [vmem:[%s0 + $0x30] sm:$0xff]
    %v22 = vld [vmem:[%s0 + $0x38] sm:$0xff]
    %v23 = vld [vmem:[%s0 + $0x40] sm:$0xff]
    %v24 = vld [vmem:[%s0 + $0x48] sm:$0xff]
    %v25 = vld [vmem:[%s0 + $0x50] sm:$0xff]
    %v26 = vld [vmem:[%s0 + $0x58] sm:$0xff]
    %v27 = vld [vmem:[%s0 + $0x60] sm:$0xff]
    %v28 = vld [vmem:[%s0 + $0x68] sm:$0xff]
    %v29 = vld [vmem:[%s0 + $0x70] sm:$0xff]
    %v30 = vld [vmem:[%s0 + $0x78] sm:$0xff]
    %v31 = vld [vmem:[%s1] sm:$0xff]
    %v32 = vld [vmem:[%s1 + $0x8] sm:$0xff]
    %v33 = vld [vmem:[%s1 + $0x10] sm:$0xff]
    %v34 = vld [vmem:[%s1 + $0x18] sm:$0xff]
    %v35 = vld [vmem:[%s1 + $0x20] sm:$0xff]
    %v36 = vld [vmem:[%s1 + $0x28] sm:$0xff]
    %v37 = vld [vmem:[%s1 + $0x30] sm:$0xff]
    %v38 = vld [vmem:[%s1 + $0x38] sm:$0xff]
    %v39 = vld [vmem:[%s1 + $0x40] sm:$0xff]
    %v40 = vld [vmem:[%s1 + $0x48] sm:$0xff]
    %v41 = vld [vmem:[%s1 + $0x50] sm:$0xff]
    %v42 = vld [vmem:[%s1 + $0x58] sm:$0xff]
    %v43 = vld [vmem:[%s1 + $0x60] sm:$0xff]
    %v44 = vld [vmem:[%s1 + $0x68] sm:$0xff]
    %v45 = vld [vmem:[%s1 + $0x70] sm:$0xff]
    %v46 = vld [vmem:[%s1 + $0x78] sm:$0xff]
    %v47 = vld [vmem:[%s2] sm:$0x1]
    %v49 = vlaneseq
    %v50 = vshrl.u32 %v49, 7
    %v51 = vsub.s32 0, %v50
    %v52 = vrot.slane %v47, %v51
    %vm54 = vcmask 261120
    %v56 = vsel %vm54, %v15, 0
    %v59 = vsel %vm54, %v16, 0
    %v62 = vsel %vm54, %v17, 0
    %v65 = vsel %vm54, %v18, 0
    %v68 = vsel %vm54, %v19, 0
    %v71 = vsel %vm54, %v20, 0
    %v74 = vsel %vm54, %v21, 0
    %v77 = vsel %vm54, %v22, 0
    %v80 = vsel %vm54, %v23, 0
    %v83 = vsel %vm54, %v24, 0
    %v86 = vsel %vm54, %v25, 0
    %v89 = vsel %vm54, %v26, 0
    %v92 = vsel %vm54, %v27, 0
    %v95 = vsel %vm54, %v28, 0
    %v98 = vsel %vm54, %v29, 0
    %v101 = vsel %vm54, %v30, 0
    %v104 = vsel %vm54, %v31, 0
    %v107 = vsel %vm54, %v32, 0
    %v110 = vsel %vm54, %v33, 0
    %v113 = vsel %vm54, %v34, 0
    %v116 = vsel %vm54, %v35, 0
    %v119 = vsel %vm54, %v36, 0
    %v122 = vsel %vm54, %v37, 0
    %v125 = vsel %vm54, %v38, 0
    %v128 = vsel %vm54, %v39, 0
    %v131 = vsel %vm54, %v40, 0
    %v134 = vsel %vm54, %v41, 0
    %v137 = vsel %vm54, %v42, 0
    %v140 = vsel %vm54, %v43, 0
    %v143 = vsel %vm54, %v44, 0
    %v146 = vsel %vm54, %v45, 0
    %v149 = vsel %vm54, %v46, 0
    %151 = vmatprep.subr.mxu0 0.0
    %152 = vmatpush1.xpose.msra.mxu0 %v104
    %153 = vmatprep.subr.mxu0 0.0
    %154 = vmatpush1.xpose.msra.mxu0 %v107
    %155 = vmatprep.subr.mxu0 0.0
    %156 = vmatpush1.xpose.msra.mxu0 %v110
    %157 = vmatprep.subr.mxu0 0.0
    %158 = vmatpush1.xpose.msra.mxu0 %v113
    %159 = vmatprep.subr.mxu0 0.0
    %160 = vmatpush1.xpose.msra.mxu0 %v116
    %161 = vmatprep.subr.mxu0 0.0
    %162 = vmatpush1.xpose.msra.mxu0 %v119
    %163 = vmatprep.subr.mxu0 0.0
    %164 = vmatpush1.xpose.msra.mxu0 %v122
    %165 = vmatprep.subr.mxu0 0.0
    %166 = vmatpush1.xpose.msra.mxu0 %v125
    %167 = vmatprep.subr.mxu0 0.0
    %168 = vmatpush1.xpose.msra.mxu0 %v128
    %169 = vmatprep.subr.mxu0 0.0
    %170 = vmatpush1.xpose.msra.mxu0 %v131
    %171 = vmatprep.subr.mxu0 0.0
    %172 = vmatpush1.xpose.msra.mxu0 %v134
    %173 = vmatprep.subr.mxu0 0.0
    %174 = vmatpush1.xpose.msra.mxu0 %v137
    %175 = vmatprep.subr.mxu0 0.0
    %176 = vmatpush1.xpose.msra.mxu0 %v140
    %177 = vmatprep.subr.mxu0 0.0
    %178 = vmatpush1.xpose.msra.mxu0 %v143
    %179 = vmatprep.subr.mxu0 0.0
    %180 = vmatpush1.xpose.msra.mxu0 %v146
    %181 = vmatprep.subr.mxu0 0.0
    %182 = vmatpush1.xpose.msra.mxu0 %v149
    %183 = vmatprep.subr.mxu0 0.0
    %184 = vmatpush1.xpose.msra.mxu0 0.0
    %185 = vmatprep.subr.mxu0 0.0
    %186 = vmatpush1.xpose.msra.mxu0 0.0
    %187 = vmatprep.subr.mxu0 0.0
    %188 = vmatpush1.xpose.msra.mxu0 0.0
    %189 = vmatprep.subr.mxu0 0.0
    %190 = vmatpush1.xpose.msra.mxu0 0.0
    %191 = vmatprep.subr.mxu0 0.0
    %192 = vmatpush1.xpose.msra.mxu0 0.0
    %193 = vmatprep.subr.mxu0 0.0
    %194 = vmatpush1.xpose.msra.mxu0 0.0
    %195 = vmatprep.subr.mxu0 0.0
    %196 = vmatpush1.xpose.msra.mxu0 0.0
    %197 = vmatprep.subr.mxu0 0.0
    %198 = vmatpush1.xpose.msra.mxu0 0.0
    %199 = vmatprep.subr.mxu0 0.0
    %200 = vmatpush1.xpose.msra.mxu0 0.0
    %201 = vmatprep.subr.mxu0 0.0
    %202 = vmatpush1.xpose.msra.mxu0 0.0
    %203 = vmatprep.subr.mxu0 0.0
    %204 = vmatpush1.xpose.msra.mxu0 0.0
    %205 = vmatprep.subr.mxu0 0.0
    %206 = vmatpush1.xpose.msra.mxu0 0.0
    %207 = vmatprep.subr.mxu0 0.0
    %208 = vmatpush1.xpose.msra.mxu0 0.0
    %209 = vmatprep.subr.mxu0 0.0
    %210 = vmatpush1.xpose.msra.mxu0 0.0
    %211 = vmatprep.subr.mxu0 0.0
    %212 = vmatpush1.xpose.msra.mxu0 0.0
    %213 = vmatprep.subr.mxu0 0.0
    %214 = vmatpush1.xpose.msra.mxu0 0.0
    %215 = vmatprep.mubr.f32.mxu0 0.0
    %216 = vmatmul.mubr.f32.gmra.mrb[0].mxu0 %v56
    %v217 = vpop.f32.mrb[0].mxu0
    %v218 = vadd.f32 %v52, %v217
    %v219 = vpop.f32.mrb[0].mxu0
    %220 = vmatprep.mubr.f32.mxu0 0.0
    %221 = vmatmul.mubr.f32.gmra.mrb[0].mxu0 %v59
    %v222 = vpop.f32.mrb[0].mxu0
    %v223 = vadd.f32 %v52, %v222
    %v224 = vpop.f32.mrb[0].mxu0
    %225 = vmatprep.mubr.f32.mxu0 0.0
    %226 = vmatmul.mubr.f32.gmra.mrb[0].mxu0 %v62
    %v227 = vpop.f32.mrb[0].mxu0
    %v228 = vadd.f32 %v52, %v227
    %v229 = vpop.f32.mrb[0].mxu0
    %230 = vmatprep.mubr.f32.mxu0 0.0
    %231 = vmatmul.mubr.f32.gmra.mrb[0].mxu0 %v65
    %v232 = vpop.f32.mrb[0].mxu0
    %v233 = vadd.f32 %v52, %v232
    %v234 = vpop.f32.mrb[0].mxu0
    %235 = vmatprep.mubr.f32.mxu0 0.0
    %236 = vmatmul.mubr.f32.gmra.mrb[0].mxu0 %v68
    %v237 = vpop.f32.mrb[0].mxu0
    %v238 = vadd.f32 %v52, %v237
    %v239 = vpop.f32.mrb[0].mxu0
    %240 = vmatprep.mubr.f32.mxu0 0.0
    %241 = vmatmul.mubr.f32.gmra.mrb[0].mxu0 %v71
    %v242 = vpop.f32.mrb[0].mxu0
    %v243 = vadd.f32 %v52, %v242
    %v244 = vpop.f32.mrb[0].mxu0
    %245 = vmatprep.mubr.f32.mxu0 0.0
    %246 = vmatmul.mubr.f32.gmra.mrb[0].mxu0 %v74
    %v247 = vpop.f32.mrb[0].mxu0
    %v248 = vadd.f32 %v52, %v247
    %v249 = vpop.f32.mrb[0].mxu0
    %250 = vmatprep.mubr.f32.mxu0 0.0
    %251 = vmatmul.mubr.f32.gmra.mrb[0].mxu0 %v77
    %v252 = vpop.f32.mrb[0].mxu0
    %v253 = vadd.f32 %v52, %v252
    %v254 = vpop.f32.mrb[0].mxu0
    %255 = vmatprep.mubr.f32.mxu0 0.0
    %256 = vmatmul.mubr.f32.gmra.mrb[0].mxu0 %v80
    %v257 = vpop.f32.mrb[0].mxu0
    %v258 = vadd.f32 %v52, %v257
    %v259 = vpop.f32.mrb[0].mxu0
    %260 = vmatprep.mubr.f32.mxu0 0.0
    %261 = vmatmul.mubr.f32.gmra.mrb[0].mxu0 %v83
    %v262 = vpop.f32.mrb[0].mxu0
    %v263 = vadd.f32 %v52, %v262
    %v264 = vpop.f32.mrb[0].mxu0
    %265 = vmatprep.mubr.f32.mxu0 0.0
    %266 = vmatmul.mubr.f32.gmra.mrb[0].mxu0 %v86
    %v267 = vpop.f32.mrb[0].mxu0
    %v268 = vadd.f32 %v52, %v267
    %v269 = vpop.f32.mrb[0].mxu0
    %270 = vmatprep.mubr.f32.mxu0 0.0
    %271 = vmatmul.mubr.f32.gmra.mrb[0].mxu0 %v89
    %v272 = vpop.f32.mrb[0].mxu0
    %v273 = vadd.f32 %v52, %v272
    %v274 = vpop.f32.mrb[0].mxu0
    %275 = vmatprep.mubr.f32.mxu0 0.0
    %276 = vmatmul.mubr.f32.gmra.mrb[0].mxu0 %v92
    %v277 = vpop.f32.mrb[0].mxu0
    %v278 = vadd.f32 %v52, %v277
    %v279 = vpop.f32.mrb[0].mxu0
    %280 = vmatprep.mubr.f32.mxu0 0.0
    %281 = vmatmul.mubr.f32.gmra.mrb[0].mxu0 %v95
    %v282 = vpop.f32.mrb[0].mxu0
    %v283 = vadd.f32 %v52, %v282
    %v284 = vpop.f32.mrb[0].mxu0
    %285 = vmatprep.mubr.f32.mxu0 0.0
    %286 = vmatmul.mubr.f32.gmra.mrb[0].mxu0 %v98
    %v287 = vpop.f32.mrb[0].mxu0
    %v288 = vadd.f32 %v52, %v287
    %v289 = vpop.f32.mrb[0].mxu0
    %290 = vmatprep.mubr.f32.mxu0 0.0
    %291 = vmatmul.mubr.f32.gmra.mrb[0].mxu0 %v101
    %v292 = vpop.f32.mrb[0].mxu0
    %v293 = vadd.f32 %v52, %v292
    %v294 = vpop.f32.mrb[0].mxu0
    %295 = vdwg.mxu0
    %v296 = vmax.f32 %v218, 0.0
    %v297 = vmax.f32 %v223, 0.0
    %v298 = vmax.f32 %v228, 0.0
    %v299 = vmax.f32 %v233, 0.0
    %v300 = vmax.f32 %v238, 0.0
    %v301 = vmax.f32 %v243, 0.0
    %v302 = vmax.f32 %v248, 0.0
    %v303 = vmax.f32 %v253, 0.0
    %v304 = vmax.f32 %v258, 0.0
    %v305 = vmax.f32 %v263, 0.0
    %v306 = vmax.f32 %v268, 0.0
    %v307 = vmax.f32 %v273, 0.0
    %v308 = vmax.f32 %v278, 0.0
    %v309 = vmax.f32 %v283, 0.0
    %v310 = vmax.f32 %v288, 0.0
    %v311 = vmax.f32 %v293, 0.0
    %v312 = vsub.f32 0.0, %v296
    %v313 = vsub.f32 0.0, %v297
    %v314 = vsub.f32 0.0, %v298
    %v315 = vsub.f32 0.0, %v299
    %v316 = vsub.f32 0.0, %v300
    %v317 = vsub.f32 0.0, %v301
    %v318 = vsub.f32 0.0, %v302
    %v319 = vsub.f32 0.0, %v303
    %v320 = vsub.f32 0.0, %v304
    %v321 = vsub.f32 0.0, %v305
    %v322 = vsub.f32 0.0, %v306
    %v323 = vsub.f32 0.0, %v307
    %v324 = vsub.f32 0.0, %v308
    %v325 = vsub.f32 0.0, %v309
    %v326 = vsub.f32 0.0, %v310
    %v327 = vsub.f32 0.0, %v311
    %v328 = vmul.f32 %v312, 1.442695
    %v329 = vpow.pop %v328
    %v330 = vmul.f32 %v313, 1.442695
    %v331 = vpow.pop %v330
    %v332 = vmul.f32 %v314, 1.442695
    %v333 = vpow.pop %v332
    %v334 = vmul.f32 %v315, 1.442695
    %v335 = vpow.pop %v334
    %v336 = vmul.f32 %v316, 1.442695
    %v337 = vpow.pop %v336
    %v338 = vmul.f32 %v317, 1.442695
    %v339 = vpow.pop %v338
    %v340 = vmul.f32 %v318, 1.442695
    %v341 = vpow.pop %v340
    %v342 = vmul.f32 %v319, 1.442695
    %v343 = vpow.pop %v342
    %v344 = vmul.f32 %v320, 1.442695
    %v345 = vpow.pop %v344
    %v346 = vmul.f32 %v321, 1.442695
    %v347 = vpow.pop %v346
    %v348 = vmul.f32 %v322, 1.442695
    %v349 = vpow.pop %v348
    %v350 = vmul.f32 %v323, 1.442695
    %v351 = vpow.pop %v350
    %v352 = vmul.f32 %v324, 1.442695
    %v353 = vpow.pop %v352
    %v354 = vmul.f32 %v325, 1.442695
    %v355 = vpow.pop %v354
    %v356 = vmul.f32 %v326, 1.442695
    %v357 = vpow.pop %v356
    %v358 = vmul.f32 %v327, 1.442695
    %v359 = vpow.pop %v358
    %360 = vst [vmem:[#allocation2] sm:$0xff] %v329
    %361 = vst [vmem:[#allocation2 + $0x8] sm:$0xff] %v331
    %362 = vst [vmem:[#allocation2 + $0x10] sm:$0xff] %v333
    %363 = vst [vmem:[#allocation2 + $0x18] sm:$0xff] %v335
    %364 = vst [vmem:[#allocation2 + $0x20] sm:$0xff] %v337
    %365 = vst [vmem:[#allocation2 + $0x28] sm:$0xff] %v339
    %366 = vst [vmem:[#allocation2 + $0x30] sm:$0xff] %v341
    %367 = vst [vmem:[#allocation2 + $0x38] sm:$0xff] %v343
    %368 = vst [vmem:[#allocation2 + $0x40] sm:$0xff] %v345
    %369 = vst [vmem:[#allocation2 + $0x48] sm:$0xff] %v347
    %370 = vst [vmem:[#allocation2 + $0x50] sm:$0xff] %v349
    %371 = vst [vmem:[#allocation2 + $0x58] sm:$0xff] %v351
    %372 = vst [vmem:[#allocation2 + $0x60] sm:$0xff] %v353
    %373 = vst [vmem:[#allocation2 + $0x68] sm:$0xff] %v355
    %374 = vst [vmem:[#allocation2 + $0x70] sm:$0xff] %v357
    %375 = vst [vmem:[#allocation2 + $0x78] sm:$0xff] %v359
    // Predicated region
    $region14: #{tpu_custom_call.1} parent=1 // pred_check
      _
    $region15: #{tpu_custom_call.1} parent=1 // pred_check_branch
      %377 = sbr.rel (0) target = $region17
    $region16: #{tpu_custom_call.1} parent=1 // pred_region
      %s379 = ssub.s32 2048, 2048
      %380 = vsyncadd [#allocation3], %s379
      %s381 = sshll.u32 [#allocation2], 4
      %s382 = int_to_ptr.vmem [resolvable:$true] %s381
      %387 = dma.vmem_to_hbm [thread:$0]  %s382, 2048, %s3, [#allocation3], 128, 128, 8
    $region17: #{tpu_custom_call.1} parent=1 // pred_fallthru
      _
    // Predicated region
    $region18: #{tpu_custom_call.1} parent=1 // pred_check
      _
    $region19: #{tpu_custom_call.1} parent=1 // pred_check_branch
      %389 = sbr.rel (0) target = $region21
    $region20: #{tpu_custom_call.1} parent=1 // pred_region
      %390 = dma.done [#allocation3], 2048
    $region21: #{tpu_custom_call.1} parent=1 // pred_fallthru
      _
    %391 = vsyncpa [#allocation3], 1

</llo_original>
